<compile_context>
chip_gen: v6e
topology: v6e:2x2x1
jax: 0.10.0
libtpu: 0.0.40
codegen_flags: <defaults>
</compile_context>

<pallas_src>
import jax
import jax.numpy as jnp
from jax.experimental import pallas as pl
from jax.experimental.pallas import tpu as pltpu


def _policy_net_kernel(xT_ref, w1T_ref, b1T_ref, w2T_ref, b2T_ref, out_ref):
    # xT: [S, TB] (batch on lanes), w1T: [H, S], b1T: [H, 1],
    # w2T: [A, H], b2T: [A, 1], out: [A, TB]
    h = jnp.dot(w1T_ref[...], xT_ref[...], preferred_element_type=jnp.float32)
    h = jnp.maximum(h + b1T_ref[...], 0.0)                         # fc1 + ReLU

    logits = jnp.dot(w2T_ref[...], h, preferred_element_type=jnp.float32)
    logits = logits + b2T_ref[...]                                  # fc2

    # Numerically stable softmax over the action axis (axis 0, length A).
    # No lane padding / masking needed; exact divide keeps row sums == 1.
    m = jnp.max(logits, axis=0, keepdims=True)
    e = jnp.exp(logits - m)
    denom = jnp.sum(e, axis=0, keepdims=True)
    out_ref[...] = (e / denom).astype(out_ref.dtype)


def _round_up(v, m):
    return ((v + m - 1) // m) * m


def policy_net_forward(x, w1, b1, w2, b2, *, block_b=1024):
    """x: [B, S]; w1: [S, H]; b1: [1, H]; w2: [H, A]; b2: [1, A] -> probs [B, A]."""
    B, S = x.shape
    H = w1.shape[1]
    A = w2.shape[1]

    # Batch lives on the lane axis -> tile width must be a multiple of 128.
    block_b = max(128, _round_up(block_b, 128))
    tb = min(block_b, _round_up(B, 128))
    # Keep at least 2 grid steps when there is enough work so v7x's two
    # TensorCores can both run on the "parallel" grid axis.
    if _round_up(B, 128) >= 2 * 128:
        tb = min(tb, _round_up(-(-B // 2), 128))
    b_pad = _round_up(B, tb)

    # Transposed (batch-on-lanes) operands; transposes happen once in XLA.
    xT = jnp.pad(x, ((0, b_pad - B), (0, 0))).T      # [S, b_pad]
    w1T, b1T = w1.T, b1.T                            # [H, S], [H, 1]
    w2T, b2T = w2.T, b2.T                            # [A, H], [A, 1]

    out = pl.pallas_call(
        _policy_net_kernel,
        out_shape=jax.ShapeDtypeStruct((A, b_pad), jnp.float32),
        grid_spec=pltpu.PrefetchScalarGridSpec(
            num_scalar_prefetch=0,
            grid=(b_pad // tb,),
            in_specs=[
                pl.BlockSpec((S, tb), lambda i: (0, i)),   # x^T: streamed by batch tile
                pl.BlockSpec((H, S), lambda i: (0, 0)),    # w1^T: resident
                pl.BlockSpec((H, 1), lambda i: (0, 0)),    # b1^T: resident
                pl.BlockSpec((A, H), lambda i: (0, 0)),    # w2^T: resident
                pl.BlockSpec((A, 1), lambda i: (0, 0)),    # b2^T: resident
            ],
            out_specs=pl.BlockSpec((A, tb), lambda i: (0, i)),
        ),
        compiler_params=pltpu.CompilerParams(
            dimension_semantics=("parallel",),  # batch tiles independent -> megacore
        ),
    )(xT, w1T, b1T, w2T, b2T)

    return out[:, :B].T                              # [B, A]


def init_params(key, state_dim, hidden_dim, action_dim):
    # Deterministic synthetic init (uniform, roughly PyTorch-Linear-like scale).
    k1, k2, k3, k4 = jax.random.split(key, 4)
    lim1 = 1.0 / (state_dim ** 0.5)
    lim2 = 1.0 / (hidden_dim ** 0.5)
    w1 = jax.random.uniform(k1, (state_dim, hidden_dim), jnp.float32, -lim1, lim1)
    b1 = jax.random.uniform(k2, (1, hidden_dim), jnp.float32, -lim1, lim1)
    w2 = jax.random.uniform(k3, (hidden_dim, action_dim), jnp.float32, -lim2, lim2)
    b2 = jax.random.uniform(k4, (1, action_dim), jnp.float32, -lim2, lim2)
    return w1, b1, w2, b2


def _reference(x, w1, b1, w2, b2):
    h = jnp.maximum(x @ w1 + b1, 0.0)
    return jax.nn.softmax(h @ w2 + b2, axis=-1)


if __name__ == "__main__":
    # Acrobot-like sizes: state_dim=6, hidden=32, actions=3.
    state_dim, hidden_dim, action_dim = 6, 32, 3
    key = jax.random.PRNGKey(0)
    kx, kp, kx2 = jax.random.split(key, 3)
    w1, b1, w2, b2 = init_params(kp, state_dim, hidden_dim, action_dim)

    # Small single-tile case (batch=8 -> one 128-lane tile, one grid step).
    x = jax.random.normal(kx, (8, state_dim), jnp.float32)
    probs = jax.block_until_ready(policy_net_forward(x, w1, b1, w2, b2))
    ref = _reference(x, w1, b1, w2, b2)
    assert probs.shape == (8, action_dim)
    assert jnp.allclose(probs, ref, atol=2e-3, rtol=2e-3)
    assert jnp.allclose(jnp.sum(probs, axis=-1), 1.0, atol=1e-3)

    # Multi-tile case exercising the batch grid + padding path
    # (batch=300, block_b=128 -> 3 grid steps, 84 padded columns sliced off).
    x2 = jax.random.normal(kx2, (300, state_dim), jnp.float32)
    probs2 = jax.block_until_ready(
        policy_net_forward(x2, w1, b1, w2, b2, block_b=128))
    ref2 = _reference(x2, w1, b1, w2, b2)
    assert probs2.shape == (300, action_dim)
    assert jnp.allclose(probs2, ref2, atol=2e-3, rtol=2e-3)
    assert jnp.allclose(jnp.sum(probs2, axis=-1), 1.0, atol=1e-3)

    print("KERNEL_OK")
</pallas_src>

<mosaic_0001>
module attributes {stable_mosaic.version = 11 : i64} {
  func.func @_policy_net_kernel(%arg0: i32, %arg1: memref<6x128xf32, #tpu.memory_space<vmem>>, %arg2: memref<32x6xf32, #tpu.memory_space<vmem>>, %arg3: memref<32x1xf32, #tpu.memory_space<vmem>>, %arg4: memref<3x32xf32, #tpu.memory_space<vmem>>, %arg5: memref<3x1xf32, #tpu.memory_space<vmem>>, %arg6: memref<3x128xf32, #tpu.memory_space<vmem>>) attributes {dimension_semantics = [#tpu.dimension_semantics<parallel>], iteration_bounds = array<i64: 1>, scalar_prefetch = 0 : i64, scratch_operands = 0 : i64, tpu.core_type = #tpu.core_type<tc>, window_params = [{transform_indices = @transform_0, window_bounds = array<i64: 6, 128>}, {pipeline_mode = #tpu.pipeline_mode<synchronous>, transform_indices = @transform_1, window_bounds = array<i64: 32, 6>}, {pipeline_mode = #tpu.pipeline_mode<synchronous>, transform_indices = @transform_2, window_bounds = array<i64: 32, 1>}, {pipeline_mode = #tpu.pipeline_mode<synchronous>, transform_indices = @transform_3, window_bounds = array<i64: 3, 32>}, {pipeline_mode = #tpu.pipeline_mode<synchronous>, transform_indices = @transform_4, window_bounds = array<i64: 3, 1>}, {transform_indices = @transform_5, window_bounds = array<i64: 3, 128>}]} {
    %c0 = arith.constant 0 : index
    %c0_0 = arith.constant 0 : index
    %0 = vector.load %arg2[%c0, %c0_0] : memref<32x6xf32, #tpu.memory_space<vmem>>, vector<32x6xf32>
    %c0_1 = arith.constant 0 : index
    %c0_2 = arith.constant 0 : index
    %1 = vector.load %arg1[%c0_1, %c0_2] : memref<6x128xf32, #tpu.memory_space<vmem>>, vector<6x128xf32>
    %cst = arith.constant dense<0.000000e+00> : vector<32x128xf32>
    %2 = tpu.matmul %0, %1, %cst {dimension_numbers = #tpu.dot_dimension_numbers<[1], [0], [0], [1], [0, 0, 1, 1], [], []>} : vector<32x6xf32>, vector<6x128xf32>, vector<32x128xf32> -> vector<32x128xf32>
    %c0_3 = arith.constant 0 : index
    %c0_4 = arith.constant 0 : index
    %3 = vector.load %arg3[%c0_3, %c0_4] : memref<32x1xf32, #tpu.memory_space<vmem>>, vector<32x1xf32>
    %4 = vector.broadcast %3 : vector<32x1xf32> to vector<32x128xf32>
    %5 = arith.addf %2, %4 : vector<32x128xf32>
    %cst_5 = arith.constant 0.000000e+00 : f32
    %6 = vector.broadcast %cst_5 : f32 to vector<32x128xf32>
    %7 = arith.maximumf %5, %6 : vector<32x128xf32>
    %c0_6 = arith.constant 0 : index
    %c0_7 = arith.constant 0 : index
    %8 = vector.load %arg4[%c0_6, %c0_7] : memref<3x32xf32, #tpu.memory_space<vmem>>, vector<3x32xf32>
    %cst_8 = arith.constant dense<0.000000e+00> : vector<3x128xf32>
    %9 = tpu.matmul %8, %7, %cst_8 {dimension_numbers = #tpu.dot_dimension_numbers<[1], [0], [0], [1], [0, 0, 1, 1], [], []>} : vector<3x32xf32>, vector<32x128xf32>, vector<3x128xf32> -> vector<3x128xf32>
    %c0_9 = arith.constant 0 : index
    %c0_10 = arith.constant 0 : index
    %10 = vector.load %arg5[%c0_9, %c0_10] : memref<3x1xf32, #tpu.memory_space<vmem>>, vector<3x1xf32>
    %11 = vector.broadcast %10 : vector<3x1xf32> to vector<3x128xf32>
    %12 = arith.addf %9, %11 : vector<3x128xf32>
    %cst_11 = arith.constant dense<0xFF800000> : vector<128xf32>
    %13 = vector.multi_reduction <maximumf>, %12, %cst_11 [0] : vector<3x128xf32> to vector<128xf32>
    %14 = vector.shape_cast %13 : vector<128xf32> to vector<1x128xf32>
    %15 = vector.broadcast %14 : vector<1x128xf32> to vector<3x128xf32>
    %16 = arith.subf %12, %15 : vector<3x128xf32>
    %17 = math.exp %16 : vector<3x128xf32>
    %cst_12 = arith.constant dense<0.000000e+00> : vector<128xf32>
    %18 = vector.multi_reduction <add>, %17, %cst_12 [0] : vector<3x128xf32> to vector<128xf32>
    %19 = vector.shape_cast %18 : vector<128xf32> to vector<1x128xf32>
    %20 = vector.broadcast %19 : vector<1x128xf32> to vector<3x128xf32>
    %21 = arith.divf %17, %20 : vector<3x128xf32>
    %c0_13 = arith.constant 0 : index
    %c0_14 = arith.constant 0 : index
    %22 = vector.load %arg6[%c0_13, %c0_14] : memref<3x128xf32, #tpu.memory_space<vmem>>, vector<3x128xf32>
    tpu.vector_store %arg6[%c0_13, %c0_14], %21 {strides = array<i32>} : memref<3x128xf32, #tpu.memory_space<vmem>>, vector<3x128xf32>,
    return
  }
  func.func @transform_0(%arg0: i32) -> (i32, i32) {
    %c0_i32 = arith.constant 0 : i32
    %c0_i32_0 = arith.constant 0 : i32
    return %c0_i32, %arg0 : i32, i32
  }
  func.func @transform_1(%arg0: i32) -> (i32, i32) {
    %c0_i32 = arith.constant 0 : i32
    %c0_i32_0 = arith.constant 0 : i32
    %c0_i32_1 = arith.constant 0 : i32
    return %c0_i32, %c0_i32_0 : i32, i32
  }
  func.func @transform_2(%arg0: i32) -> (i32, i32) {
    %c0_i32 = arith.constant 0 : i32
    %c0_i32_0 = arith.constant 0 : i32
    %c0_i32_1 = arith.constant 0 : i32
    return %c0_i32, %c0_i32_0 : i32, i32
  }
  func.func @transform_3(%arg0: i32) -> (i32, i32) {
    %c0_i32 = arith.constant 0 : i32
    %c0_i32_0 = arith.constant 0 : i32
    %c0_i32_1 = arith.constant 0 : i32
    return %c0_i32, %c0_i32_0 : i32, i32
  }
  func.func @transform_4(%arg0: i32) -> (i32, i32) {
    %c0_i32 = arith.constant 0 : i32
    %c0_i32_0 = arith.constant 0 : i32
    %c0_i32_1 = arith.constant 0 : i32
    return %c0_i32, %c0_i32_0 : i32, i32
  }
  func.func @transform_5(%arg0: i32) -> (i32, i32) {
    %c0_i32 = arith.constant 0 : i32
    %c0_i32_0 = arith.constant 0 : i32
    return %c0_i32, %arg0 : i32, i32
  }
}

</mosaic_0001>

<llo_original>
// kernel: tpu_custom_call.1
$region0: #{tpu_custom_call.1}
  #allocation0 [shape = 'u32[]', space=smem, size = 0x4, offset = 0x4, fixed_abs, tag = 'smem constant byte address 0x4 - core index']
  #allocation1 [shape = 'u32[144,128]{1,0:T(1,128)}', space=vmem, size = 0x12000, scoped, tag = 'internal scratch']
  %s0 = inlined_call_operand.vmem [shape: f32[6,128], index: 0, kind: input, shape index: {}]
  %s1 = inlined_call_operand.vmem [shape: f32[32,6], index: 1, kind: input, shape index: {}]
  %s2 = inlined_call_operand.vmem [shape: f32[32,1], index: 2, kind: input, shape index: {}]
  %s3 = inlined_call_operand.vmem [shape: f32[3,32], index: 3, kind: input, shape index: {}]
  %s4 = inlined_call_operand.vmem [shape: f32[3,1], index: 4, kind: input, shape index: {}]
  %s5 = inlined_call_operand.hbm [shape: f32[3,128], index: 5, kind: output, shape index: {}]
  %s6 = sld [smem:[#allocation0]]
  $region30: #{tpu_custom_call.1} parent=0
    _
  %s8 = ssub.s32 1, %s6
  %s9 = scalar_select 0, %s8, %s6
  $region1: #{tpu_custom_call.1} parent=0
    #allocation2 [shape = 'u8[2048]{0}', space=vmem, size = 0x800, scoped, tag = 'output window, operand 0, single buffered']
    #allocation3 [shape = 's32[1]{0}', space=sflag, size = 0x4, scoped, tag = 'scoped memory for tpu_custom_call.1']
    %10 = vsyncpa [#allocation3], 0
    // Predicated region
    $region2: #{tpu_custom_call.1} parent=1 // pred_check
      _
    $region3: #{tpu_custom_call.1} parent=1 // pred_check_branch
      %12 = sbr.rel (0) target = $region5
    $region4: #{tpu_custom_call.1} parent=1 // pred_region
      _
    $region5: #{tpu_custom_call.1} parent=1 // pred_fallthru
      _
    // Predicated region
    $region6: #{tpu_custom_call.1} parent=1 // pred_check
      _
    $region7: #{tpu_custom_call.1} parent=1 // pred_check_branch
      %14 = sbr.rel (0) target = $region9
    $region8: #{tpu_custom_call.1} parent=1 // pred_region
      _
    $region9: #{tpu_custom_call.1} parent=1 // pred_fallthru
      _
    // Predicated region
    $region10: #{tpu_custom_call.1} parent=1 // pred_check
      _
    $region11: #{tpu_custom_call.1} parent=1 // pred_check_branch
      %16 = sbr.rel (0) target = $region13
    $region12: #{tpu_custom_call.1} parent=1 // pred_region
      _
    $region13: #{tpu_custom_call.1} parent=1 // pred_fallthru
      _
    // Predicated region
    $region14: #{tpu_custom_call.1} parent=1 // pred_check
      _
    $region15: #{tpu_custom_call.1} parent=1 // pred_check_branch
      %18 = sbr.rel (0) target = $region17
    $region16: #{tpu_custom_call.1} parent=1 // pred_region
      _
    $region17: #{tpu_custom_call.1} parent=1 // pred_fallthru
      _
    // Predicated region
    $region18: #{tpu_custom_call.1} parent=1 // pred_check
      _
    $region19: #{tpu_custom_call.1} parent=1 // pred_check_branch
      %20 = sbr.rel (0) target = $region21
    $region20: #{tpu_custom_call.1} parent=1 // pred_region
      _
    $region21: #{tpu_custom_call.1} parent=1 // pred_fallthru
      _
    %v21 = vld [vmem:[%s1] sm:$0xff]
    %v22 = vld [vmem:[%s1 + $0x8] sm:$0xff]
    %v23 = vld [vmem:[%s1 + $0x10] sm:$0xff]
    %v24 = vld [vmem:[%s1 + $0x18] sm:$0xff]
    %v25 = vld [vmem:[%s0] sm:$0x3f]
    %v26 = vld [vmem:[%s2] sm:$0xff]
    %v27 = vld [vmem:[%s2 + $0x8] sm:$0xff]
    %v28 = vld [vmem:[%s2 + $0x10] sm:$0xff]
    %v29 = vld [vmem:[%s2 + $0x18] sm:$0xff]
    %31 = vset.pattern.permute.xlu0 0
    %32 = vperm.xlu0 %31, %v26
    %v33 = vpop.permute.xlu0 %32
    %36 = vset.pattern.permute.xlu0 0
    %37 = vperm.xlu0 %36, %v27
    %v38 = vpop.permute.xlu0 %37
    %41 = vset.pattern.permute.xlu0 0
    %42 = vperm.xlu0 %41, %v28
    %v43 = vpop.permute.xlu0 %42
    %46 = vset.pattern.permute.xlu0 0
    %47 = vperm.xlu0 %46, %v29
    %v48 = vpop.permute.xlu0 %47
    %vm50 = vcmask 48128
    %v52 = vsel %vm50, %v21, 0
    %v55 = vsel %vm50, %v22, 0
    %v58 = vsel %vm50, %v23, 0
    %v61 = vsel %vm50, %v24, 0
    %vm63 = vcmask 1045504
    %v65 = vsel %vm63, %v25, 0
    %67 = vmatprep.subr.mxu0 0.0
    %68 = vmatpush1.msra.mxu0 0.0
    %69 = vmatprep.subr.mxu0 0.0
    %70 = vmatpush1.msra.mxu0 0.0
    %71 = vmatprep.subr.mxu0 0.0
    %72 = vmatpush1.msra.mxu0 0.0
    %73 = vmatprep.subr.mxu0 0.0
    %74 = vmatpush1.msra.mxu0 0.0
    %75 = vmatprep.subr.mxu0 0.0
    %76 = vmatpush1.msra.mxu0 0.0
    %77 = vmatprep.subr.mxu0 0.0
    %78 = vmatpush1.msra.mxu0 0.0
    %79 = vmatprep.subr.mxu0 0.0
    %80 = vmatpush1.msra.mxu0 0.0
    %81 = vmatprep.subr.mxu0 0.0
    %82 = vmatpush1.msra.mxu0 0.0
    %83 = vmatprep.subr.mxu0 0.0
    %84 = vmatpush1.msra.mxu0 0.0
    %85 = vmatprep.subr.mxu0 0.0
    %86 = vmatpush1.msra.mxu0 0.0
    %87 = vmatprep.subr.mxu0 0.0
    %88 = vmatpush1.msra.mxu0 0.0
    %89 = vmatprep.subr.mxu0 0.0
    %90 = vmatpush1.msra.mxu0 0.0
    %91 = vmatprep.subr.mxu0 0.0
    %92 = vmatpush1.msra.mxu0 0.0
    %93 = vmatprep.subr.mxu0 0.0
    %94 = vmatpush1.msra.mxu0 0.0
    %95 = vmatprep.subr.mxu0 0.0
    %96 = vmatpush1.msra.mxu0 0.0
    %97 = vmatprep.subr.mxu0 0.0
    %98 = vmatpush1.msra.mxu0 %v65
    %99 = vmatprep.subr.mxu0 0.0
    %100 = vmatpush2.msra.mxu0 0.0
    %101 = vmatprep.subr.mxu0 0.0
    %102 = vmatpush2.msra.mxu0 0.0
    %103 = vmatprep.subr.mxu0 0.0
    %104 = vmatpush2.msra.mxu0 0.0
    %105 = vmatprep.subr.mxu0 0.0
    %106 = vmatpush2.msra.mxu0 0.0
    %107 = vmatprep.subr.mxu0 0.0
    %108 = vmatpush2.msra.mxu0 0.0
    %109 = vmatprep.subr.mxu0 0.0
    %110 = vmatpush2.msra.mxu0 0.0
    %111 = vmatprep.subr.mxu0 0.0
    %112 = vmatpush2.msra.mxu0 0.0
    %113 = vmatprep.subr.mxu0 0.0
    %114 = vmatpush2.msra.mxu0 0.0
    %115 = vmatprep.subr.mxu0 0.0
    %116 = vmatpush2.msra.mxu0 0.0
    %117 = vmatprep.subr.mxu0 0.0
    %118 = vmatpush2.msra.mxu0 0.0
    %119 = vmatprep.subr.mxu0 0.0
    %120 = vmatpush2.msra.mxu0 0.0
    %121 = vmatprep.subr.mxu0 0.0
    %122 = vmatpush2.msra.mxu0 0.0
    %123 = vmatprep.subr.mxu0 0.0
    %124 = vmatpush2.msra.mxu0 0.0
    %125 = vmatprep.subr.mxu0 0.0
    %126 = vmatpush2.msra.mxu0 0.0
    %127 = vmatprep.subr.mxu0 0.0
    %128 = vmatpush2.msra.mxu0 0.0
    %129 = vmatprep.subr.mxu0 0.0
    %130 = vmatpush2.msra.mxu0 0.0
    %131 = vmatprep.mubr.f32.mxu0 0.0
    %132 = vmatmul.mubr.f32.gmra.mxu0 %v52
    %v133 = vpop.f32.mrf.mxu0
    %v134 = vadd.f32 %v33, %v133
    %v135 = vpop.f32.mrf.mxu0
    %136 = vmatprep.mubr.f32.mxu0 0.0
    %137 = vmatmul.mubr.f32.gmra.mxu0 %v55
    %v138 = vpop.f32.mrf.mxu0
    %v139 = vadd.f32 %v38, %v138
    %v140 = vpop.f32.mrf.mxu0
    %141 = vmatprep.mubr.f32.mxu0 0.0
    %142 = vmatmul.mubr.f32.gmra.mxu0 %v58
    %v143 = vpop.f32.mrf.mxu0
    %v144 = vadd.f32 %v43, %v143
    %v145 = vpop.f32.mrf.mxu0
    %146 = vmatprep.mubr.f32.mxu0 0.0
    %147 = vmatmul.mubr.f32.gmra.mxu0 %v61
    %v148 = vpop.f32.mrf.mxu0
    %v149 = vadd.f32 %v48, %v148
    %v150 = vpop.f32.mrf.mxu0
    %151 = vdwg.mxu0
    %v152 = vmax.f32 %v134, 0.0
    %v153 = vmax.f32 %v139, 0.0
    %v154 = vmax.f32 %v144, 0.0
    %v155 = vmax.f32 %v149, 0.0
    %v156 = vld [vmem:[%s3] sm:$0x7]
    %v157 = vld [vmem:[%s4] sm:$0x7]
    %159 = vset.pattern.permute.xlu0 0
    %160 = vperm.xlu0 %159, %v157
    %v161 = vpop.permute.xlu0 %160
    %vm163 = vcmask 261120
    %v165 = vsel %vm163, %v156, 0
    %167 = vmatprep.subr.mxu0 0.0
    %168 = vmatpush1.msra.mxu0 0.0
    %169 = vmatprep.subr.mxu0 0.0
    %170 = vmatpush1.msra.mxu0 0.0
    %171 = vmatprep.subr.mxu0 0.0
    %172 = vmatpush1.msra.mxu0 0.0
    %173 = vmatprep.subr.mxu0 0.0
    %174 = vmatpush1.msra.mxu0 0.0
    %175 = vmatprep.subr.mxu0 0.0
    %176 = vmatpush1.msra.mxu0 0.0
    %177 = vmatprep.subr.mxu0 0.0
    %178 = vmatpush1.msra.mxu0 0.0
    %179 = vmatprep.subr.mxu0 0.0
    %180 = vmatpush1.msra.mxu0 0.0
    %181 = vmatprep.subr.mxu0 0.0
    %182 = vmatpush1.msra.mxu0 0.0
    %183 = vmatprep.subr.mxu0 0.0
    %184 = vmatpush1.msra.mxu0 0.0
    %185 = vmatprep.subr.mxu0 0.0
    %186 = vmatpush1.msra.mxu0 0.0
    %187 = vmatprep.subr.mxu0 0.0
    %188 = vmatpush1.msra.mxu0 0.0
    %189 = vmatprep.subr.mxu0 0.0
    %190 = vmatpush1.msra.mxu0 0.0
    %191 = vmatprep.subr.mxu0 0.0
    %192 = vmatpush1.msra.mxu0 %v155
    %193 = vmatprep.subr.mxu0 0.0
    %194 = vmatpush1.msra.mxu0 %v154
    %195 = vmatprep.subr.mxu0 0.0
    %196 = vmatpush1.msra.mxu0 %v153
    %197 = vmatprep.subr.mxu0 0.0
    %198 = vmatpush1.msra.mxu0 %v152
    %199 = vmatprep.subr.mxu0 0.0
    %200 = vmatpush2.msra.mxu0 0.0
    %201 = vmatprep.subr.mxu0 0.0
    %202 = vmatpush2.msra.mxu0 0.0
    %203 = vmatprep.subr.mxu0 0.0
    %204 = vmatpush2.msra.mxu0 0.0
    %205 = vmatprep.subr.mxu0 0.0
    %206 = vmatpush2.msra.mxu0 0.0
    %207 = vmatprep.subr.mxu0 0.0
    %208 = vmatpush2.msra.mxu0 0.0
    %209 = vmatprep.subr.mxu0 0.0
    %210 = vmatpush2.msra.mxu0 0.0
    %211 = vmatprep.subr.mxu0 0.0
    %212 = vmatpush2.msra.mxu0 0.0
    %213 = vmatprep.subr.mxu0 0.0
    %214 = vmatpush2.msra.mxu0 0.0
    %215 = vmatprep.subr.mxu0 0.0
    %216 = vmatpush2.msra.mxu0 0.0
    %217 = vmatprep.subr.mxu0 0.0
    %218 = vmatpush2.msra.mxu0 0.0
    %219 = vmatprep.subr.mxu0 0.0
    %220 = vmatpush2.msra.mxu0 0.0
    %221 = vmatprep.subr.mxu0 0.0
    %222 = vmatpush2.msra.mxu0 0.0
    %223 = vmatprep.subr.mxu0 0.0
    %224 = vmatpush2.msra.mxu0 0.0
    %225 = vmatprep.subr.mxu0 0.0
    %226 = vmatpush2.msra.mxu0 0.0
    %227 = vmatprep.subr.mxu0 0.0
    %228 = vmatpush2.msra.mxu0 0.0
    %229 = vmatprep.subr.mxu0 0.0
    %230 = vmatpush2.msra.mxu0 0.0
    %231 = vmatprep.mubr.f32.mxu0 0.0
    %232 = vmatmul.mubr.f32.gmra.mxu0 %v165
    %v233 = vpop.f32.mrf.mxu0
    %v234 = vadd.f32 %v161, %v233
    %v235 = vpop.f32.mrf.mxu0
    %236 = vdwg.mxu0
    %vm237 = vcmask 1042432
    %v238 = vsel %vm237, %v234, -inf
    %v239 = vrot.slane %v238, 4
    %v240 = vmax.f32 %v238, %v239
    %v241 = vrot.slane %v240, 2
    %v242 = vmax.f32 %v240, %v241
    %v243 = vrot.slane %v242, 1
    %v244 = vmax.f32 %v242, %v243
    %v245 = vsub.f32 %v234, %v244
    %v246 = vmul.f32 %v245, 1.442695
    %v247 = vpow.pop %v246
    %v248 = vsel %vm237, %v247, 0.0
    %v249 = vrot.slane %v248, 4
    %v250 = vadd.f32 %v248, %v249
    %v251 = vrot.slane %v250, 2
    %v252 = vadd.f32 %v250, %v251
    %v253 = vrot.slane %v252, 1
    %v254 = vadd.f32 %v252, %v253
    %v255 = vrcp.pop %v254
    %v256 = vmul.f32 %v247, %v255
    %257 = vst [vmem:[#allocation2] sm:$0x7] %v256
    // Predicated region
    $region22: #{tpu_custom_call.1} parent=1 // pred_check
      _
    $region23: #{tpu_custom_call.1} parent=1 // pred_check_branch
      %259 = sbr.rel (0) target = $region25
    $region24: #{tpu_custom_call.1} parent=1 // pred_region
      %s261 = ssub.s32 64, 64
      %262 = vsyncadd [#allocation3], %s261
      %s264 = sshll.u32 [#allocation2], 4
      %s265 = int_to_ptr.vmem [resolvable:$true] %s264
      %267 = dma.vmem_to_hbm [thread:$0]  %s265, 64, %s5, [#allocation3]
    $region25: #{tpu_custom_call.1} parent=1 // pred_fallthru
      _
    // Predicated region
    $region26: #{tpu_custom_call.1} parent=1 // pred_check
      _
    $region27: #{tpu_custom_call.1} parent=1 // pred_check_branch
      %269 = sbr.rel (0) target = $region29
    $region28: #{tpu_custom_call.1} parent=1 // pred_region
      %270 = dma.done [#allocation3], 64
    $region29: #{tpu_custom_call.1} parent=1 // pred_fallthru
      _
    %271 = vsyncpa [#allocation3], 1

</llo_original>
